<compile_context>
chip_gen: v5e
topology: v5e:2x2
jax: 0.10.0
libtpu: 0.0.40
codegen_flags: <defaults>
</compile_context>

<pallas_src>
import math
from functools import partial

import jax
import jax.numpy as jnp
from jax import lax
from jax.experimental import pallas as pl
from jax.experimental.pallas import tpu as pltpu


def _qkv_attention_kernel(q_ref, k_ref, v_ref, o_ref, *, qk_scale, t_actual,
                          mxu_dtype=None):
    # q_ref: (hb, ch, tq)   k_ref, v_ref: (hb, ch, T_pad)   o_ref: (hb, ch, tq)
    hb = q_ref.shape[0]
    tq = q_ref.shape[2]
    t_pad = k_ref.shape[2]

    need_mask = t_actual != t_pad
    if need_mask:
        # Hoisted out of the per-head loop (broadcasts are not CSE'd).
        key_idx = lax.broadcasted_iota(jnp.int32, (t_pad, tq), 0)
        key_valid = key_idx < t_actual

    def one_head(h):
        q = q_ref[h]                          # (ch, tq)
        k = k_ref[h]                          # (ch, T_pad)
        v = v_ref[h]                          # (ch, T_pad)

        # Folded scaling: (q*s) @ (k*s) == (q*s*s) @ k; only q is scaled.
        qs = q * qk_scale
        if mxu_dtype is not None:             # opt-in bf16 MXU for f32 inputs
            qs = qs.astype(mxu_dtype)
            k = k.astype(mxu_dtype)
            v = v.astype(mxu_dtype)

        # s[t_key, t_query] = sum_c k[c, t_key] * q[c, t_query]
        # lhs-contracted dot_general: MXU-native, no relayout / transpose.
        s = lax.dot_general(
            k, qs,
            dimension_numbers=(((0,), (0,)), ((), ())),
            preferred_element_type=jnp.float32)          # (T_pad, tq) f32

        if need_mask:
            s = jnp.where(key_valid, s, -jnp.inf)

        # Softmax over keys (axis 0) with deferred normalization.
        m = jnp.max(s, axis=0, keepdims=True)            # (1, tq)
        p = jnp.exp(s - m)                               # (T_pad, tq) f32
        l = jnp.sum(p, axis=0, keepdims=True)            # (1, tq)

        # PV matmul on unnormalized weights; operands in input dtype, f32 acc.
        out = jnp.dot(v, p.astype(v.dtype),
                      preferred_element_type=jnp.float32)  # (ch, tq)

        inv_l = pl.reciprocal(l, approx=True)            # EUP slot, ~free
        o_ref[h] = (out * inv_l).astype(o_ref.dtype)

    if hb == 1:
        one_head(0)
    else:
        # fori_loop (not a static Python unroll) bounds the live range of the
        # big (T_pad, tq) temporaries to a single head at a time.
        def body(h, carry):
            one_head(h)
            return carry
        lax.fori_loop(0, hb, body, 0)


def _vmem_capacity_bytes():
    """Best-effort query of the chip's physical VMEM; conservative fallback."""
    try:
        info = pltpu.get_tpu_info()
        cap = getattr(info, "vmem_capacity_bytes", None)
        if cap:
            return int(cap)
    except Exception:
        pass
    return 64 * 1024 * 1024  # v7x-sized: safe lower bound for all generations


def _sublane_multiple(dtype):
    """Native sublane packing multiple: 8 for f32, 16 for bf16, 32 for 8-bit."""
    itemsize = jnp.dtype(dtype).itemsize
    return max(8, 32 // max(itemsize, 1))


def _pick_tq(t_pad, vmem_cap):
    if vmem_cap >= (96 << 20):
        candidates = (512, 256, 128)          # 128 MiB parts: bigger tiles
    else:
        candidates = (128,) if t_pad >= 8192 else (256, 128)
    for cand in candidates:
        if t_pad % cand == 0:
            return cand
    return 128                                # t_pad is always a 128-multiple


def _pick_heads_per_block(bh, t_pad, tq, ch_pad, itemsize, vmem_cap):
    """Batch several heads per grid step when they fit; keep >= 2 grid steps."""
    cap = 8 if vmem_cap >= (96 << 20) else 4
    if bh > 1:
        cap = min(cap, max(1, bh // 2))
    # Double-buffered DMA footprint per head: K + V (full length) + q + out tiles.
    per_head = 2 * (2 * ch_pad * t_pad + 2 * ch_pad * tq) * itemsize
    budget = vmem_cap // 2
    best = 1
    for d in range(1, cap + 1):
        if bh % d == 0 and d * per_head <= budget:
            best = d
    return best


def qkv_attention_legacy(qkv, n_heads, *, tq=None, heads_per_block=None,
                         use_bf16_mxu=False):
    """qkv: [N, H*3*C, T] -> [N, H*C, T] (matches QKVAttentionLegacy.forward)."""
    bs, width, length = qkv.shape
    assert width % (3 * n_heads) == 0
    ch = width // (3 * n_heads)
    bh = bs * n_heads

    # PyTorch scales q and k each by d^-0.25; we fold both onto q: 1/sqrt(d).
    qk_scale = 1.0 / math.sqrt(ch)

    vmem_cap = _vmem_capacity_bytes()
    itemsize = jnp.dtype(qkv.dtype).itemsize
    sub = _sublane_multiple(qkv.dtype)

    # Pad channels to the dtype-native sublane multiple and T to a multiple of
    # 128 lanes so blocks are tile-aligned and output stores are lane-dense.
    ch_pad = -(-ch // sub) * sub
    t_pad = -(-length // 128) * 128

    # NOTE: when no padding is needed this is a pure reshape (no extra HBM
    # round trip); the pad + final slice only appear for unaligned shapes.
    x = qkv.reshape(bh, 3, ch, length)
    if ch_pad != ch or t_pad != length:
        x = jnp.pad(x, ((0, 0), (0, 0), (0, ch_pad - ch), (0, t_pad - length)))
    x = x.reshape(bh, 3 * ch_pad, t_pad)

    if tq is None:
        tq = _pick_tq(t_pad, vmem_cap)
    assert t_pad % tq == 0

    if heads_per_block is None:
        hb = _pick_heads_per_block(bh, t_pad, tq, ch_pad, itemsize, vmem_cap)
    else:
        hb = heads_per_block
        assert bh % hb == 0

    grid = (bh // hb, t_pad // tq)

    mxu_dtype = jnp.bfloat16 if (use_bf16_mxu and qkv.dtype == jnp.float32) else None
    kernel = partial(_qkv_attention_kernel, qk_scale=qk_scale, t_actual=length,
                     mxu_dtype=mxu_dtype)

    # K/V blocks keep a constant block index across the query axis, so Pallas
    # keeps them resident rather than re-fetching.  On small-VMEM parts with
    # very long sequences, drop them to a single buffer to stay within budget.
    kv_kwargs = {}
    if vmem_cap < (96 << 20) and t_pad >= 8192:
        kv_kwargs = dict(pipeline_mode=pl.Buffered(1))

    in_specs = [
        # q: tiled over the query axis
        pl.BlockSpec((hb, ch_pad, tq), lambda i, j: (i, 0, j)),
        # k, v: full key length per head block
        pl.BlockSpec((hb, ch_pad, t_pad), lambda i, j: (i, 1, 0), **kv_kwargs),
        pl.BlockSpec((hb, ch_pad, t_pad), lambda i, j: (i, 2, 0), **kv_kwargs),
    ]

    vmem_limit = (vmem_cap * 3) // 4          # ~96 MiB on 128 MiB parts, 48 MiB on v7x

    out = pl.pallas_call(
        kernel,
        out_shape=jax.ShapeDtypeStruct((bh, ch_pad, t_pad), qkv.dtype),
        grid=grid,
        in_specs=in_specs,
        out_specs=pl.BlockSpec((hb, ch_pad, tq), lambda i, j: (i, 0, j)),
        compiler_params=pltpu.CompilerParams(
            # Head axis is the only megacore-sharded axis: preserves per-core
            # K/V residency across query tiles on 2-TC chips (v7x).
            dimension_semantics=("parallel", "arbitrary"),
            vmem_limit_bytes=vmem_limit,
        ),
    )(x, x, x)

    return out[:, :ch, :length].reshape(bs, n_heads * ch, length)


def _reference_jax(qkv, n_heads):
    """Pure-JAX transcription of the PyTorch forward for verification."""
    bs, width, length = qkv.shape
    ch = width // (3 * n_heads)
    x = qkv.reshape(bs * n_heads, 3 * ch, length)
    q, k, v = x[:, :ch], x[:, ch:2 * ch], x[:, 2 * ch:]
    scale = 1.0 / math.sqrt(math.sqrt(ch))
    w = jnp.einsum('ikj,ikl->ijl', q * scale, k * scale)
    w = jax.nn.softmax(w, axis=-1)
    out = jnp.einsum('ijl,ikl->ijk', v, w)
    return out.reshape(bs, n_heads * ch, length)


def _run_case(name, N, H, C, T, dtype, tol, **kwargs):
    key = jax.random.PRNGKey(0)
    qkv = jax.random.normal(key, (N, H * 3 * C, T), dtype=jnp.float32)
    qkv = qkv.astype(dtype)

    out = qkv_attention_legacy(qkv, n_heads=H, **kwargs)
    out = jax.block_until_ready(out)

    ref = _reference_jax(qkv.astype(jnp.float32), n_heads=H)
    assert out.shape == (N, H * C, T), (name, out.shape)
    err = jnp.max(jnp.abs(out.astype(jnp.float32) - ref))
    assert float(err) < tol, f"{name}: max abs err {float(err)} >= {tol}"


if __name__ == "__main__":
    # (a) f32, T not a multiple of 128 -> T padding + key masking, hb > 1
    #     (exercises the fori_loop head path).
    _run_case("f32_pad_T", N=2, H=2, C=16, T=100, dtype=jnp.float32, tol=1e-2)
    # (b) f32, C not a multiple of 8 -> channel padding, hb == 1.
    _run_case("f32_pad_C", N=1, H=3, C=12, T=64, dtype=jnp.float32, tol=1e-2)
    # (c) bf16 inputs -> bf16 MXU operands with f32 accumulation, hb > 1.
    _run_case("bf16", N=2, H=2, C=32, T=128, dtype=jnp.bfloat16, tol=5e-2)
    # (d) bf16 with C not a multiple of 16 -> dtype-native (16) sublane padding.
    _run_case("bf16_pad_C", N=1, H=2, C=20, T=48, dtype=jnp.bfloat16, tol=5e-2)
    # (e) opt-in bf16 MXU fast path for f32 inputs.
    _run_case("f32_bf16mxu", N=2, H=2, C=16, T=128, dtype=jnp.float32, tol=5e-2,
              use_bf16_mxu=True)

    print("KERNEL_OK")
</pallas_src>

<mosaic_0001>
module attributes {stable_mosaic.version = 11 : i64} {
  func.func @_qkv_attention_kernel(%arg0: i32, %arg1: i32, %arg2: memref<2x16x128xf32, #tpu.memory_space<vmem>>, %arg3: memref<2x16x128xf32, #tpu.memory_space<vmem>>, %arg4: memref<2x16x128xf32, #tpu.memory_space<vmem>>, %arg5: memref<2x16x128xf32, #tpu.memory_space<vmem>>) attributes {dimension_semantics = [#tpu.dimension_semantics<parallel>, #tpu.dimension_semantics<arbitrary>], iteration_bounds = array<i64: 2, 1>, scalar_prefetch = 0 : i64, scratch_operands = 0 : i64, tpu.core_type = #tpu.core_type<tc>, window_params = [{transform_indices = @transform_0, window_bounds = array<i64: 2, 16, 128>}, {transform_indices = @transform_1, window_bounds = array<i64: 2, 16, 128>}, {transform_indices = @transform_2, window_bounds = array<i64: 2, 16, 128>}, {transform_indices = @transform_3, window_bounds = array<i64: 2, 16, 128>}]} {
    %0 = tpu.iota {dimensions = array<i32: 0>} : vector<128x128xi32>
    %c100_i32 = arith.constant 100 : i32
    %1 = vector.broadcast %c100_i32 : i32 to vector<128x128xi32>
    %2 = arith.cmpi slt, %0, %1 : vector<128x128xi32>
    %c0_i32 = arith.constant 0 : i32
    %c2_i32 = arith.constant 2 : i32
    %3 = arith.addi %c0_i32, %c2_i32 : i32
    %c1_i32 = arith.constant 1 : i32
    scf.for %arg6 = %c0_i32 to %3 step %c1_i32  : i32 {
      %4 = arith.index_cast %arg6 : i32 to index
      %c0 = arith.constant 0 : index
      %c0_1 = arith.constant 0 : index
      %5 = vector.load %arg2[%4, %c0, %c0_1] : memref<2x16x128xf32, #tpu.memory_space<vmem>>, vector<1x16x128xf32>
      %6 = vector.shape_cast %5 : vector<1x16x128xf32> to vector<16x128xf32>
      %7 = arith.index_cast %arg6 : i32 to index
      %c0_2 = arith.constant 0 : index
      %c0_3 = arith.constant 0 : index
      %8 = vector.load %arg3[%7, %c0_2, %c0_3] : memref<2x16x128xf32, #tpu.memory_space<vmem>>, vector<1x16x128xf32>
      %9 = vector.shape_cast %8 : vector<1x16x128xf32> to vector<16x128xf32>
      %10 = arith.index_cast %arg6 : i32 to index
      %c0_4 = arith.constant 0 : index
      %c0_5 = arith.constant 0 : index
      %11 = vector.load %arg4[%10, %c0_4, %c0_5] : memref<2x16x128xf32, #tpu.memory_space<vmem>>, vector<1x16x128xf32>
      %12 = vector.shape_cast %11 : vector<1x16x128xf32> to vector<16x128xf32>
      %cst = arith.constant 2.500000e-01 : f32
      %13 = vector.broadcast %cst : f32 to vector<16x128xf32>
      %14 = arith.mulf %6, %13 : vector<16x128xf32>
      %cst_6 = arith.constant dense<0.000000e+00> : vector<128x128xf32>
      %15 = tpu.matmul %9, %14, %cst_6 {dimension_numbers = #tpu.dot_dimension_numbers<[0], [0], [1], [1], [0, 1, 1, 1], [], []>} : vector<16x128xf32>, vector<16x128xf32>, vector<128x128xf32> -> vector<128x128xf32>
      %cst_7 = arith.constant 0xFF800000 : f32
      %16 = vector.broadcast %cst_7 : f32 to vector<128x128xf32>
      %17 = arith.select %2, %15, %16 : vector<128x128xi1>, vector<128x128xf32>
      %cst_8 = arith.constant dense<0xFF800000> : vector<128xf32>
      %18 = vector.multi_reduction <maximumf>, %17, %cst_8 [0] : vector<128x128xf32> to vector<128xf32>
      %19 = vector.shape_cast %18 : vector<128xf32> to vector<1x128xf32>
      %20 = vector.broadcast %19 : vector<1x128xf32> to vector<128x128xf32>
      %21 = arith.subf %17, %20 : vector<128x128xf32>
      %22 = math.exp %21 : vector<128x128xf32>
      %cst_9 = arith.constant dense<0.000000e+00> : vector<128xf32>
      %23 = vector.multi_reduction <add>, %22, %cst_9 [0] : vector<128x128xf32> to vector<128xf32>
      %24 = vector.shape_cast %23 : vector<128xf32> to vector<1x128xf32>
      %cst_10 = arith.constant dense<0.000000e+00> : vector<16x128xf32>
      %25 = tpu.matmul %12, %22, %cst_10 {dimension_numbers = #tpu.dot_dimension_numbers<[1], [0], [0], [1], [0, 0, 1, 1], [], []>} : vector<16x128xf32>, vector<128x128xf32>, vector<16x128xf32> -> vector<16x128xf32>
      %26 = tpu.reciprocal %24 {approx = true} : vector<1x128xf32> -> vector<1x128xf32>
      %27 = vector.broadcast %26 : vector<1x128xf32> to vector<16x128xf32>
      %28 = arith.mulf %25, %27 : vector<16x128xf32>
      %29 = arith.index_cast %arg6 : i32 to index
      %c0_11 = arith.constant 0 : index
      %c0_12 = arith.constant 0 : index
      %30 = vector.load %arg5[%29, %c0_11, %c0_12] : memref<2x16x128xf32, #tpu.memory_space<vmem>>, vector<1x16x128xf32>
      %31 = vector.shape_cast %30 : vector<1x16x128xf32> to vector<16x128xf32>
      %32 = vector.shape_cast %28 : vector<16x128xf32> to vector<1x16x128xf32>
      tpu.vector_store %arg5[%29, %c0_11, %c0_12], %32 {strides = array<i32>} : memref<2x16x128xf32, #tpu.memory_space<vmem>>, vector<1x16x128xf32>,
    }
    %c2_i32_0 = arith.constant 2 : i32
    return
  }
  func.func @transform_0(%arg0: i32, %arg1: i32) -> (i32, i32, i32) {
    %c0_i32 = arith.constant 0 : i32
    %c0_i32_0 = arith.constant 0 : i32
    return %arg0, %c0_i32, %arg1 : i32, i32, i32
  }
  func.func @transform_1(%arg0: i32, %arg1: i32) -> (i32, i32, i32) {
    %c1_i32 = arith.constant 1 : i32
    %c0_i32 = arith.constant 0 : i32
    %c0_i32_0 = arith.constant 0 : i32
    return %arg0, %c1_i32, %c0_i32 : i32, i32, i32
  }
  func.func @transform_2(%arg0: i32, %arg1: i32) -> (i32, i32, i32) {
    %c2_i32 = arith.constant 2 : i32
    %c0_i32 = arith.constant 0 : i32
    %c0_i32_0 = arith.constant 0 : i32
    return %arg0, %c2_i32, %c0_i32 : i32, i32, i32
  }
  func.func @transform_3(%arg0: i32, %arg1: i32) -> (i32, i32, i32) {
    %c0_i32 = arith.constant 0 : i32
    %c0_i32_0 = arith.constant 0 : i32
    return %arg0, %c0_i32, %arg1 : i32, i32, i32
  }
}

</mosaic_0001>

<llo_original>
// kernel: tpu_custom_call.1
$region0: #{tpu_custom_call.1}
  #allocation0 [shape = 'u32[]', space=smem, size = 0x4, offset = 0x4, fixed_abs, tag = 'smem constant byte address 0x4 - core index']
  #allocation1 [shape = 'u32[72,128]{1,0:T(1,128)}', space=vmem, size = 0x9000, scoped, tag = 'internal scratch']
  #allocation9 [shape = 's32[]', space=sflag, size = 0x4, offset = 0, fixed_abs, tag = 'sflag constant byte address 0x0 - dummy sync flag']
  #allocation11 [shape = 's32[]', space=sflag, size = 0x4, offset = 0, fixed_abs, tag = 'sflag constant byte address 0x0 - dummy sync flag']
  #allocation13 [shape = 's32[]', space=sflag, size = 0x4, offset = 0, fixed_abs, tag = 'sflag constant byte address 0x0 - dummy sync flag']
  %s0 = inlined_call_operand.hbm [shape: f32[4,48,128], index: 0, kind: input, shape index: {}]
  %s1 = inlined_call_operand.hbm [shape: f32[4,48,128], index: 1, kind: input, shape index: {}]
  %s2 = inlined_call_operand.hbm [shape: f32[4,48,128], index: 2, kind: input, shape index: {}]
  %s3 = inlined_call_operand.hbm [shape: f32[4,16,128], index: 3, kind: output, shape index: {}]
  %s4 = sld [smem:[#allocation0]]
  $region64: #{tpu_custom_call.1} parent=0
    _
  %s6 = ssub.s32 1, %s4
  %s7 = scalar_select 0, %s6, %s4
  $region1: #{tpu_custom_call.1} parent=0
    #allocation2 [shape = 'u8[32768]{0}', space=vmem, size = 0x8000, scoped, tag = 'input window, operand 0']
    #allocation3 [shape = 's32[2]{0}', space=sflag, size = 0x8, scoped, tag = 'scoped memory for tpu_custom_call.1']
    #allocation4 [shape = 's32[2]{0}', space=sflag, size = 0x8, scoped, tag = 'scoped memory for tpu_custom_call.1']
    #allocation5 [shape = 'u8[32768]{0}', space=vmem, size = 0x8000, scoped, tag = 'input window, operand 1']
    #allocation6 [shape = 's32[2]{0}', space=sflag, size = 0x8, scoped, tag = 'scoped memory for tpu_custom_call.1']
    #allocation7 [shape = 'u8[32768]{0}', space=vmem, size = 0x8000, scoped, tag = 'input window, operand 2']
    #allocation8 [shape = 'u8[32768]{0}', space=vmem, size = 0x8000, scoped, tag = 'output window, operand 0']
    %8 = vsyncpa [#allocation3], 0
    %s9 = scalar_lea.sflag [#allocation3], 1
    %10 = vsyncpa %s9, 0
    %11 = vsyncpa [#allocation6], 0
    %s12 = scalar_lea.sflag [#allocation6], 1
    %13 = vsyncpa %s12, 0
    %14 = vsyncpa [#allocation4], 0
    %s15 = scalar_lea.sflag [#allocation4], 1
    %16 = vsyncpa %s15, 0
    loop: start=0, step=1, limit=4
    $region2: #{tpu_custom_call.1} parent=1 // loop_pre_header
      _
    $region3: #{tpu_custom_call.1} parent=1 // loop_header
      %s18 = sphi 0, %s22
      %p19 = scmp.ge.s32.totalorder %s18, 4
      %s25 = sphi 0, %s37
      %s26 = sphi 0, %s33
      %s27 = sphi 0, %s25
      %s28 = sphi 0, %s26
      %s29 = sphi 0, %s27
      %s30 = sphi 0, %s28
      %s42 = sphi 0, %s44
      %s45 = sphi 0, %s42
      %s46 = sphi 0, %s45
      %s62 = sphi 0, %s46
      %s68 = sphi 0, %s70
      %s71 = sphi 0, %s68
      %s72 = sphi 0, %s71
      %s88 = sphi 0, %s72
      %s94 = sphi 0, %s96
      %s97 = sphi 0, %s94
      %s98 = sphi 0, %s97
      %s114 = sphi 0, %s98
      %s122 = sphi 0, %s124
      %s125 = sphi 0, %s122
      %s126 = sphi 0, %s125
      %s142 = sphi 0, %s126
    $region4: #{tpu_custom_call.1} parent=1 // loop_header_branch
      %21 = sbr.rel (%p19) target = $region8
    $region5: #{tpu_custom_call.1} parent=1 // loop_body
      %s23 = ssub.s32 %s18, 1
      %s24 = ssub.s32 %s18, 2
      %s31 = sadd.s32 1, %s26
      %p32 = scmp.ge.s32.totalorder %s31, 1
      %s33 = scalar_select %p32, 0, %s31
      %s34 = sadd.s32 1, %s25
      %s35 = scalar_select %p32, %s34, %s25
      %p36 = scmp.ge.s32.totalorder %s35, 2
      %s37 = scalar_select %p36, 0, %s35
      %s38 = ssub.s32 %s25, %s37
      %s39 = ssub.s32 %s26, %s33
      %s40 = sor.u32 %s38, %s39
      %p41 = scmp.eq.s32.totalorder %s40, 0
      %s43 = sadd.s32 %s42, 1
      %s44 = scalar_select %p41, %s42, %s43
      %p47 = pneg %p41
      %p48 = scmp.eq.s32.totalorder %s18, 1
      %p49 = por %p47, %p48
      %p50 = scmp.ne.s32.totalorder %s42, %s45
      %p51 = scmp.eq.s32.totalorder %s18, 0
      %p52 = por %p50, %p51
      %p53 = scmp.ne.s32.totalorder %s42, %s45
      %p54 = scmp.eq.s32.totalorder %s23, 1
      %p55 = por %p53, %p54
      %p56 = scmp.ne.s32.totalorder %s45, %s46
      %p57 = scmp.eq.s32.totalorder %s23, 0
      %p58 = por %p56, %p57
      %p59 = scmp.ne.s32.totalorder %s45, %s46
      %p60 = scmp.eq.s32.totalorder %s24, 1
      %p61 = por %p59, %p60
      %p63 = scmp.ne.s32.totalorder %s46, %s62
      %p64 = scmp.eq.s32.totalorder %s24, 0
      %p65 = por %p63, %p64
      %s66 = ssub.s32 %s25, %s37
      %p67 = scmp.eq.s32.totalorder %s66, 0
      %s69 = sadd.s32 %s68, 1
      %s70 = scalar_select %p67, %s68, %s69
      %p73 = pneg %p67
      %p74 = scmp.eq.s32.totalorder %s18, 1
      %p75 = por %p73, %p74
      %p76 = scmp.ne.s32.totalorder %s68, %s71
      %p77 = scmp.eq.s32.totalorder %s18, 0
      %p78 = por %p76, %p77
      %p79 = scmp.ne.s32.totalorder %s68, %s71
      %p80 = scmp.eq.s32.totalorder %s23, 1
      %p81 = por %p79, %p80
      %p82 = scmp.ne.s32.totalorder %s71, %s72
      %p83 = scmp.eq.s32.totalorder %s23, 0
      %p84 = por %p82, %p83
      %p85 = scmp.ne.s32.totalorder %s71, %s72
      %p86 = scmp.eq.s32.totalorder %s24, 1
      %p87 = por %p85, %p86
      %p89 = scmp.ne.s32.totalorder %s72, %s88
      %p90 = scmp.eq.s32.totalorder %s24, 0
      %p91 = por %p89, %p90
      %s92 = ssub.s32 %s25, %s37
      %p93 = scmp.eq.s32.totalorder %s92, 0
      %s95 = sadd.s32 %s94, 1
      %s96 = scalar_select %p93, %s94, %s95
      %p99 = pneg %p93
      %p100 = scmp.eq.s32.totalorder %s18, 1
      %p101 = por %p99, %p100
      %p102 = scmp.ne.s32.totalorder %s94, %s97
      %p103 = scmp.eq.s32.totalorder %s18, 0
      %p104 = por %p102, %p103
      %p105 = scmp.ne.s32.totalorder %s94, %s97
      %p106 = scmp.eq.s32.totalorder %s23, 1
      %p107 = por %p105, %p106
      %p108 = scmp.ne.s32.totalorder %s97, %s98
      %p109 = scmp.eq.s32.totalorder %s23, 0
      %p110 = por %p108, %p109
      %p111 = scmp.ne.s32.totalorder %s97, %s98
      %p112 = scmp.eq.s32.totalorder %s24, 1
      %p113 = por %p111, %p112
      %p115 = scmp.ne.s32.totalorder %s98, %s114
      %p116 = scmp.eq.s32.totalorder %s24, 0
      %p117 = por %p115, %p116
      %s118 = ssub.s32 %s25, %s37
      %s119 = ssub.s32 %s26, %s33
      %s120 = sor.u32 %s118, %s119
      %p121 = scmp.eq.s32.totalorder %s120, 0
      %s123 = sadd.s32 %s122, 1
      %s124 = scalar_select %p121, %s122, %s123
      %p127 = pneg %p121
      %p128 = scmp.eq.s32.totalorder %s18, 1
      %p129 = por %p127, %p128
      %p130 = scmp.ne.s32.totalorder %s122, %s125
      %p131 = scmp.eq.s32.totalorder %s18, 0
      %p132 = por %p130, %p131
      %p133 = scmp.ne.s32.totalorder %s122, %s125
      %p134 = scmp.eq.s32.totalorder %s23, 1
      %p135 = por %p133, %p134
      %p136 = scmp.ne.s32.totalorder %s125, %s126
      %p137 = scmp.eq.s32.totalorder %s23, 0
      %p138 = por %p136, %p137
      %p139 = scmp.ne.s32.totalorder %s125, %s126
      %p140 = scmp.eq.s32.totalorder %s24, 1
      %p141 = por %p139, %p140
      %p143 = scmp.ne.s32.totalorder %s126, %s142
      %p144 = scmp.eq.s32.totalorder %s24, 0
      %p145 = por %p143, %p144
      %p146 = scmp.le.s32.totalorder 1, %s18
      %p147 = scmp.lt.s32.totalorder %s18, 3
      %p148 = pnand %p146, %p147
      %p149 = pneg %p148
      // Predicated region
      $region9: #{tpu_custom_call.1} parent=5 // pred_check
        _
      $region10: #{tpu_custom_call.1} parent=5 // pred_check_branch
        %151 = sbr.rel (%p148) target = $region12
      $region11: #{tpu_custom_call.1} parent=5 // pred_region
        %s152 = ssub.s32 %s18, 1
      $region12: #{tpu_custom_call.1} parent=5 // pred_fallthru
        _
      %p153 = scmp.lt.s32.totalorder %s18, 2
      // Predicated region
      $region13: #{tpu_custom_call.1} parent=5 // pred_check
        %p154 = pneg %p153
      $region14: #{tpu_custom_call.1} parent=5 // pred_check_branch
        %156 = sbr.rel (%p154) target = $region16
      $region15: #{tpu_custom_call.1} parent=5 // pred_region
        // Predicated region
        $region17: #{tpu_custom_call.1} parent=15 // pred_check
          %p157 = pneg %p52
        $region18: #{tpu_custom_call.1} parent=15 // pred_check_branch
          %159 = sbr.rel (%p157) target = $region20
        $region19: #{tpu_custom_call.1} parent=15 // pred_region
          #allocation10 [shape = 'u32[6]{0}', space=smem, size = 0x18, scoped, tag = 'DMA stride descriptor']
          %s160 = sand.u32 %s42, 1
          %s161 = scalar_lea.sflag [#allocation3], %s160
          %s162 = sand.u32 %s42, 1
          %s163 = smul.addr %s162, 32
          %s164 = scalar_lea.vmem [#allocation2], %s163
          %s165 = smul.u32 2, %s25
          %167 = vsyncadd %s161, 0
          %s168 = smul.addr %s165, 6
          %s169 = sadd.s32 %s26, %s168
          %s170 = smul.addr %s169, 8
          %s171 = scalar_lea.hbm %s0, %s170
          %s173 = sshll.u32 1, 14
          %s174 = sxor.u32 4294967295, %s173
          %s176 = sld [smem:[#allocation0]]
          %s177 = sadd.s32 2, %s176
          %s179 = sshll.u32 7, 26
          %s180 = sxor.u32 4294967295, %s179
          %s181 = sand.u32 0, %s180
          %s182 = sshll.u32 %s177, 26
          %s183 = sor.u32 %s181, %s182
          %s184 = sshll.u32 %s171, 4
          %s185 = int_to_ptr.hbm [resolvable:$true] %s184
          %s186 = sshll.u32 %s164, 4
          %s187 = int_to_ptr.vmem [resolvable:$true] %s186
          %193 = sst [smem:[#allocation10]] 768
          %s194 = scalar_lea.smem [#allocation10], 1
          %195 = sst [smem:[%s194]] 256
          %s196 = scalar_lea.smem [#allocation10], 2
          %197 = sst [smem:[%s196]] 2
          %s198 = scalar_lea.smem [#allocation10], 3
          %199 = sst [smem:[%s198]] 128
          %s200 = scalar_lea.smem [#allocation10], 4
          %201 = sst [smem:[%s200]] 128
          %s202 = scalar_lea.smem [#allocation10], 5
          %203 = sst [smem:[%s202]] 8
          %205 = dma.general %s185, 512, %s187, %s161, [#allocation9], [#allocation10], %s183, 0
        $region20: #{tpu_custom_call.1} parent=15 // pred_fallthru
          _
        // Predicated region
        $region21: #{tpu_custom_call.1} parent=15 // pred_check
          %p206 = pneg %p78
        $region22: #{tpu_custom_call.1} parent=15 // pred_check_branch
          %208 = sbr.rel (%p206) target = $region24
        $region23: #{tpu_custom_call.1} parent=15 // pred_region
          #allocation12 [shape = 'u32[6]{0}', space=smem, size = 0x18, scoped, tag = 'DMA stride descriptor']
          %s209 = sand.u32 %s18, 1
          %s210 = scalar_lea.sflag [#allocation6], %s209
          %s211 = sand.u32 %s68, 1
          %s212 = smul.addr %s211, 32
          %s213 = scalar_lea.vmem [#allocation5], %s212
          %s214 = smul.u32 2, %s25
          %216 = vsyncadd %s210, 0
          %s217 = smul.addr %s214, 6
          %s218 = sadd.s32 2, %s217
          %s219 = smul.addr %s218, 8
          %s220 = scalar_lea.hbm %s1, %s219
          %s222 = sshll.u32 1, 14
          %s223 = sxor.u32 4294967295, %s222
          %s225 = sld [smem:[#allocation0]]
          %s226 = sadd.s32 2, %s225
          %s228 = sshll.u32 7, 26
          %s229 = sxor.u32 4294967295, %s228
          %s230 = sand.u32 0, %s229
          %s231 = sshll.u32 %s226, 26
          %s232 = sor.u32 %s230, %s231
          %s233 = sshll.u32 %s220, 4
          %s234 = int_to_ptr.hbm [resolvable:$true] %s233
          %s235 = sshll.u32 %s213, 4
          %s236 = int_to_ptr.vmem [resolvable:$true] %s235
          %242 = sst [smem:[#allocation12]] 768
          %s243 = scalar_lea.smem [#allocation12], 1
          %244 = sst [smem:[%s243]] 256
          %s245 = scalar_lea.smem [#allocation12], 2
          %246 = sst [smem:[%s245]] 2
          %s247 = scalar_lea.smem [#allocation12], 3
          %248 = sst [smem:[%s247]] 128
          %s249 = scalar_lea.smem [#allocation12], 4
          %250 = sst [smem:[%s249]] 128
          %s251 = scalar_lea.smem [#allocation12], 5
          %252 = sst [smem:[%s251]] 8
          %254 = dma.general %s234, 512, %s236, %s210, [#allocation11], [#allocation12], %s232, 0
        $region24: #{tpu_custom_call.1} parent=15 // pred_fallthru
          _
        // Predicated region
        $region25: #{tpu_custom_call.1} parent=15 // pred_check
          %p255 = pneg %p104
        $region26: #{tpu_custom_call.1} parent=15 // pred_check_branch
          %257 = sbr.rel (%p255) target = $region28
        $region27: #{tpu_custom_call.1} parent=15 // pred_region
          #allocation14 [shape = 'u32[6]{0}', space=smem, size = 0x18, scoped, tag = 'DMA stride descriptor']
          %s258 = sand.u32 %s18, 1
          %s259 = scalar_lea.sflag [#allocation6], %s258
          %s260 = sand.u32 %s94, 1
          %s261 = smul.addr %s260, 32
          %s262 = scalar_lea.vmem [#allocation7], %s261
          %s263 = smul.u32 2, %s25
          %265 = vsyncadd %s259, 0
          %s266 = smul.addr %s263, 6
          %s267 = sadd.s32 4, %s266
          %s268 = smul.addr %s267, 8
          %s269 = scalar_lea.hbm %s2, %s268
          %s271 = sshll.u32 1, 14
          %s272 = sxor.u32 4294967295, %s271
          %s274 = sld [smem:[#allocation0]]
          %s275 = sadd.s32 2, %s274
          %s277 = sshll.u32 7, 26
          %s278 = sxor.u32 4294967295, %s277
          %s279 = sand.u32 0, %s278
          %s280 = sshll.u32 %s275, 26
          %s281 = sor.u32 %s279, %s280
          %s282 = sshll.u32 %s269, 4
          %s283 = int_to_ptr.hbm [resolvable:$true] %s282
          %s284 = sshll.u32 %s262, 4
          %s285 = int_to_ptr.vmem [resolvable:$true] %s284
          %291 = sst [smem:[#allocation14]] 768
          %s292 = scalar_lea.smem [#allocation14], 1
          %293 = sst [smem:[%s292]] 256
          %s294 = scalar_lea.smem [#allocation14], 2
          %295 = sst [smem:[%s294]] 2
          %s296 = scalar_lea.smem [#allocation14], 3
          %297 = sst [smem:[%s296]] 128
          %s298 = scalar_lea.smem [#allocation14], 4
          %299 = sst [smem:[%s298]] 128
          %s300 = scalar_lea.smem [#allocation14], 5
          %301 = sst [smem:[%s300]] 8
          %303 = dma.general %s283, 512, %s285, %s259, [#allocation13], [#allocation14], %s281, 0
        $region28: #{tpu_custom_call.1} parent=15 // pred_fallthru
          _
      $region16: #{tpu_custom_call.1} parent=5 // pred_fallthru
        _
      %p304 = scmp.le.s32.totalorder 1, %s18
      %p305 = scmp.lt.s32.totalorder %s18, 3
      %p306 = pnand %p304, %p305
      %p307 = pneg %p306
      // Predicated region
      $region29: #{tpu_custom_call.1} parent=5 // pred_check
        _
      $region30: #{tpu_custom_call.1} parent=5 // pred_check_branch
        %309 = sbr.rel (%p306) target = $region32
      $region31: #{tpu_custom_call.1} parent=5 // pred_region
        %s310 = ssub.s32 %s18, 1
        %s311 = sand.u32 %s45, 1
        %s312 = scalar_lea.sflag [#allocation3], %s311
        %s313 = sand.u32 %s45, 1
        %s314 = smul.addr %s313, 32
        %s315 = scalar_lea.vmem [#allocation2], %s314
        // Predicated region
        $region33: #{tpu_custom_call.1} parent=31 // pred_check
          %p316 = pneg %p58
        $region34: #{tpu_custom_call.1} parent=31 // pred_check_branch
          %318 = sbr.rel (%p316) target = $region36
        $region35: #{tpu_custom_call.1} parent=31 // pred_region
          %320 = dma.done %s312, 512
        $region36: #{tpu_custom_call.1} parent=31 // pred_fallthru
          _
        %s321 = sand.u32 %s23, 1
        %s322 = scalar_lea.sflag [#allocation6], %s321
        %s323 = sand.u32 %s71, 1
        %s324 = smul.addr %s323, 32
        %s325 = scalar_lea.vmem [#allocation5], %s324
        // Predicated region
        $region37: #{tpu_custom_call.1} parent=31 // pred_check
          %p326 = pneg %p84
        $region38: #{tpu_custom_call.1} parent=31 // pred_check_branch
          %328 = sbr.rel (%p326) target = $region40
        $region39: #{tpu_custom_call.1} parent=31 // pred_region
          %330 = dma.done %s322, 512
        $region40: #{tpu_custom_call.1} parent=31 // pred_fallthru
          _
        %s331 = sand.u32 %s23, 1
        %s332 = scalar_lea.sflag [#allocation6], %s331
        %s333 = sand.u32 %s97, 1
        %s334 = smul.addr %s333, 32
        %s335 = scalar_lea.vmem [#allocation7], %s334
        // Predicated region
        $region41: #{tpu_custom_call.1} parent=31 // pred_check
          %p336 = pneg %p110
        $region42: #{tpu_custom_call.1} parent=31 // pred_check_branch
          %338 = sbr.rel (%p336) target = $region44
        $region43: #{tpu_custom_call.1} parent=31 // pred_region
          %340 = dma.done %s332, 512
        $region44: #{tpu_custom_call.1} parent=31 // pred_fallthru
          _
        %s341 = sand.u32 %s45, 1
        %s342 = scalar_lea.sflag [#allocation3], %s341
        %s343 = sand.u32 %s45, 1
        %s344 = smul.addr %s343, 32
        %s345 = scalar_lea.vmem [#allocation2], %s344
        %p346 = pneg %p58
        %p347 = pneg %p55
        %s348 = sand.u32 %s23, 1
        %s349 = scalar_lea.sflag [#allocation6], %s348
        %s350 = sand.u32 %s71, 1
        %s351 = smul.addr %s350, 32
        %s352 = scalar_lea.vmem [#allocation5], %s351
        %p353 = pneg %p84
        %p354 = pneg %p81
        %s355 = sand.u32 %s23, 1
        %s356 = scalar_lea.sflag [#allocation6], %s355
        %s357 = sand.u32 %s97, 1
        %s358 = smul.addr %s357, 32
        %s359 = scalar_lea.vmem [#allocation7], %s358
        %p360 = pneg %p110
        %p361 = pneg %p107
        %p362 = pneg %p138
        %p363 = pneg %p135
        %s364 = sand.u32 %s125, 1
        %s365 = scalar_lea.sflag [#allocation4], %s364
        %s366 = sand.u32 %s125, 1
        %s367 = smul.addr %s366, 32
        %s368 = scalar_lea.vmem [#allocation8], %s367
        %s369 = smul.u32 2, %s27
        %s370 = smul.u32 2, %s27
        %s371 = smul.u32 2, %s27
        %s372 = smul.u32 2, %s27
        %v373 = vlaneseq
        %v374 = vshrl.u32 %v373, 7
        %v375 = vadd.s32 %v374, 8
        %v376 = vadd.s32 %v374, 16
        %v377 = vadd.s32 %v374, 24
        %v378 = vadd.s32 %v374, 32
        %v379 = vadd.s32 %v374, 40
        %v380 = vadd.s32 %v374, 48
        %v381 = vadd.s32 %v374, 56
        %v382 = vadd.s32 %v374, 64
        %v383 = vadd.s32 %v374, 72
        %v384 = vadd.s32 %v374, 80
        %v385 = vadd.s32 %v374, 88
        %v386 = vadd.s32 %v374, 96
        %v387 = vadd.s32 %v374, 104
        %v388 = vadd.s32 %v374, 112
        %v389 = vadd.s32 %v374, 120
        %vm390 = vcmp.lt.s32.totalorder %v374, 100
        %vm391 = vcmp.lt.s32.totalorder %v375, 100
        %vm392 = vcmp.lt.s32.totalorder %v376, 100
        %vm393 = vcmp.lt.s32.totalorder %v377, 100
        %vm394 = vcmp.lt.s32.totalorder %v378, 100
        %vm395 = vcmp.lt.s32.totalorder %v379, 100
        %vm396 = vcmp.lt.s32.totalorder %v380, 100
        %vm397 = vcmp.lt.s32.totalorder %v381, 100
        %vm398 = vcmp.lt.s32.totalorder %v382, 100
        %vm399 = vcmp.lt.s32.totalorder %v383, 100
        %vm400 = vcmp.lt.s32.totalorder %v384, 100
        %vm401 = vcmp.lt.s32.totalorder %v385, 100
        %vm402 = vcmp.lt.s32.totalorder %v386, 100
        %vm403 = vcmp.lt.s32.totalorder %v387, 100
        %vm404 = vcmp.lt.s32.totalorder %v388, 100
        %vm405 = vcmp.lt.s32.totalorder %v389, 100
        loop: start=0, step=1, limit=2
        $region45: #{tpu_custom_call.1} parent=31 // loop_pre_header
          _
        $region46: #{tpu_custom_call.1} parent=31 // loop_header
          %s407 = sphi 0, %s411
          %p408 = scmp.ge.s32.totalorder %s407, 2
        $region47: #{tpu_custom_call.1} parent=31 // loop_header_branch
          %410 = sbr.rel (%p408) target = $region51
        $region48: #{tpu_custom_call.1} parent=31 // loop_body
          %s412 = smul.u32 %s407, 16
          %s413 = scalar_lea.vmem %s315, %s412 [#allocation2]
          %v414 = vld [vmem:[%s413] sm:$0xff]
          %v415 = vld [vmem:[%s413 + $0x8] sm:$0xff]
          %s416 = scalar_lea.vmem %s325, %s412 [#allocation5]
          %v417 = vld [vmem:[%s416] sm:$0xff]
          %v418 = vld [vmem:[%s416 + $0x8] sm:$0xff]
          %s419 = scalar_lea.vmem %s335, %s412 [#allocation7]
          %v420 = vld [vmem:[%s419] sm:$0xff]
          %v421 = vld [vmem:[%s419 + $0x8] sm:$0xff]
          %v422 = vmul.f32 %v414, 0.25
          %v423 = vmul.f32 %v415, 0.25
          %424 = vxpose.xlu0.b32.start [1/16] %v417, 128
          %425 = vxpose.xlu0.b32.cont [2/16] %v418, 128
          %426 = vxpose.xlu0.b32.cont [3/16] 0.0, 128
          %427 = vxpose.xlu0.b32.cont [4/16] 0.0, 128
          %428 = vxpose.xlu0.b32.cont [5/16] 0.0, 128
          %429 = vxpose.xlu0.b32.cont [6/16] 0.0, 128
          %430 = vxpose.xlu0.b32.cont [7/16] 0.0, 128
          %431 = vxpose.xlu0.b32.cont [8/16] 0.0, 128
          %432 = vxpose.xlu0.b32.cont [9/16] 0.0, 128
          %433 = vxpose.xlu0.b32.cont [10/16] 0.0, 128
          %434 = vxpose.xlu0.b32.cont [11/16] 0.0, 128
          %435 = vxpose.xlu0.b32.cont [12/16] 0.0, 128
          %436 = vxpose.xlu0.b32.cont [13/16] 0.0, 128
          %437 = vxpose.xlu0.b32.cont [14/16] 0.0, 128
          %438 = vxpose.xlu0.b32.cont [15/16] 0.0, 128
          %439 = vxpose.xlu0.b32.end [16/16] 0.0, 128
          %v440 = vpop.trf.xlu0
          %v441 = vpop.trf.xlu0
          %v442 = vpop.trf.xlu0
          %v443 = vpop.trf.xlu0
          %v444 = vpop.trf.xlu0
          %v445 = vpop.trf.xlu0
          %v446 = vpop.trf.xlu0
          %v447 = vpop.trf.xlu0
          %v448 = vpop.trf.xlu0
          %v449 = vpop.trf.xlu0
          %v450 = vpop.trf.xlu0
          %v451 = vpop.trf.xlu0
          %v452 = vpop.trf.xlu0
          %v453 = vpop.trf.xlu0
          %v454 = vpop.trf.xlu0
          %v455 = vpop.trf.xlu0
          %vm456 = vcmask 130048
          %v458 = vsel %vm456, %v440, 0
          %v461 = vsel %vm456, %v441, 0
          %v464 = vsel %vm456, %v442, 0
          %v467 = vsel %vm456, %v443, 0
          %v470 = vsel %vm456, %v444, 0
          %v473 = vsel %vm456, %v445, 0
          %v476 = vsel %vm456, %v446, 0
          %v479 = vsel %vm456, %v447, 0
          %v482 = vsel %vm456, %v448, 0
          %v485 = vsel %vm456, %v449, 0
          %v488 = vsel %vm456, %v450, 0
          %v491 = vsel %vm456, %v451, 0
          %v494 = vsel %vm456, %v452, 0
          %v497 = vsel %vm456, %v453, 0
          %v500 = vsel %vm456, %v454, 0
          %v503 = vsel %vm456, %v455, 0
          %505 = vmatpush.msra.mxu0 0.0
          %506 = vmatpush.msra.mxu0 0.0
          %507 = vmatpush.msra.mxu0 0.0
          %508 = vmatpush.msra.mxu0 0.0
          %509 = vmatpush.msra.mxu0 0.0
          %510 = vmatpush.msra.mxu0 0.0
          %511 = vmatpush.msra.mxu0 0.0
          %512 = vmatpush.msra.mxu0 0.0
          %513 = vmatpush.msra.mxu0 0.0
          %514 = vmatpush.msra.mxu0 0.0
          %515 = vmatpush.msra.mxu0 0.0
          %516 = vmatpush.msra.mxu0 0.0
          %517 = vmatpush.msra.mxu0 0.0
          %518 = vmatpush.msra.mxu0 0.0
          %519 = vmatpush.msra.mxu0 %v423
          %520 = vmatpush.msra.mxu0 %v422
          %521 = vmatmul.f32.gmra.mxu0 %v458
          %v522 = vpop.f32.mrf.mxu0
          %v523 = vadd.f32 0.0, %v522
          %524 = vmatmul.f32.gmra.mxu0 %v461
          %v525 = vpop.f32.mrf.mxu0
          %v526 = vadd.f32 0.0, %v525
          %527 = vmatmul.f32.gmra.mxu0 %v464
          %v528 = vpop.f32.mrf.mxu0
          %v529 = vadd.f32 0.0, %v528
          %530 = vmatmul.f32.gmra.mxu0 %v467
          %v531 = vpop.f32.mrf.mxu0
          %v532 = vadd.f32 0.0, %v531
          %533 = vmatmul.f32.gmra.mxu0 %v470
          %v534 = vpop.f32.mrf.mxu0
          %v535 = vadd.f32 0.0, %v534
          %536 = vmatmul.f32.gmra.mxu0 %v473
          %v537 = vpop.f32.mrf.mxu0
          %v538 = vadd.f32 0.0, %v537
          %539 = vmatmul.f32.gmra.mxu0 %v476
          %v540 = vpop.f32.mrf.mxu0
          %v541 = vadd.f32 0.0, %v540
          %542 = vmatmul.f32.gmra.mxu0 %v479
          %v543 = vpop.f32.mrf.mxu0
          %v544 = vadd.f32 0.0, %v543
          %545 = vmatmul.f32.gmra.mxu0 %v482
          %v546 = vpop.f32.mrf.mxu0
          %v547 = vadd.f32 0.0, %v546
          %548 = vmatmul.f32.gmra.mxu0 %v485
          %v549 = vpop.f32.mrf.mxu0
          %v550 = vadd.f32 0.0, %v549
          %551 = vmatmul.f32.gmra.mxu0 %v488
          %v552 = vpop.f32.mrf.mxu0
          %v553 = vadd.f32 0.0, %v552
          %554 = vmatmul.f32.gmra.mxu0 %v491
          %v555 = vpop.f32.mrf.mxu0
          %v556 = vadd.f32 0.0, %v555
          %557 = vmatmul.f32.gmra.mxu0 %v494
          %v558 = vpop.f32.mrf.mxu0
          %v559 = vadd.f32 0.0, %v558
          %560 = vmatmul.f32.gmra.mxu0 %v497
          %v561 = vpop.f32.mrf.mxu0
          %v562 = vadd.f32 0.0, %v561
          %563 = vmatmul.f32.gmra.mxu0 %v500
          %v564 = vpop.f32.mrf.mxu0
          %v565 = vadd.f32 0.0, %v564
          %566 = vmatmul.f32.gmra.mxu0 %v503
          %v567 = vpop.f32.mrf.mxu0
          %v568 = vadd.f32 0.0, %v567
          %569 = vdwg.mxu0
          %v570 = vsel %vm390, %v523, -inf
          %v571 = vsel %vm391, %v526, -inf
          %v572 = vsel %vm392, %v529, -inf
          %v573 = vsel %vm393, %v532, -inf
          %v574 = vsel %vm394, %v535, -inf
          %v575 = vsel %vm395, %v538, -inf
          %v576 = vsel %vm396, %v541, -inf
          %v577 = vsel %vm397, %v544, -inf
          %v578 = vsel %vm398, %v547, -inf
          %v579 = vsel %vm399, %v550, -inf
          %v580 = vsel %vm400, %v553, -inf
          %v581 = vsel %vm401, %v556, -inf
          %v582 = vsel %vm402, %v559, -inf
          %v583 = vsel %vm403, %v562, -inf
          %v584 = vsel %vm404, %v565, -inf
          %v585 = vsel %vm405, %v568, -inf
          %v586 = vmax.f32 %v570, %v574
          %v587 = vmax.f32 %v571, %v575
          %v588 = vmax.f32 %v572, %v576
          %v589 = vmax.f32 %v573, %v577
          %v590 = vmax.f32 %v586, %v578
          %v591 = vmax.f32 %v587, %v579
          %v592 = vmax.f32 %v588, %v580
          %v593 = vmax.f32 %v589, %v581
          %v594 = vmax.f32 %v590, %v582
          %v595 = vmax.f32 %v591, %v583
          %v596 = vmax.f32 %v592, %v584
          %v597 = vmax.f32 %v593, %v585
          %v598 = vmax.f32 %v594, %v595
          %v599 = vmax.f32 %v596, %v597
          %v600 = vmax.f32 %v598, %v599
          %v601 = vrot.slane %v600, 4
          %v602 = vmax.f32 %v600, %v601
          %v603 = vrot.slane %v602, 2
          %v604 = vmax.f32 %v602, %v603
          %v605 = vrot.slane %v604, 1
          %v606 = vmax.f32 %v604, %v605
          %v607 = vsub.f32 %v570, %v606
          %v608 = vsub.f32 %v571, %v606
          %v609 = vsub.f32 %v572, %v606
          %v610 = vsub.f32 %v573, %v606
          %v611 = vsub.f32 %v574, %v606
          %v612 = vsub.f32 %v575, %v606
          %v613 = vsub.f32 %v576, %v606
          %v614 = vsub.f32 %v577, %v606
          %v615 = vsub.f32 %v578, %v606
          %v616 = vsub.f32 %v579, %v606
          %v617 = vsub.f32 %v580, %v606
          %v618 = vsub.f32 %v581, %v606
          %v619 = vsub.f32 %v582, %v606
          %v620 = vsub.f32 %v583, %v606
          %v621 = vsub.f32 %v584, %v606
          %v622 = vsub.f32 %v585, %v606
          %v623 = vmul.f32 %v607, 1.442695
          %v624 = vpow.pop %v623
          %v625 = vmul.f32 %v608, 1.442695
          %v626 = vpow.pop %v625
          %v627 = vmul.f32 %v609, 1.442695
          %v628 = vpow.pop %v627
          %v629 = vmul.f32 %v610, 1.442695
          %v630 = vpow.pop %v629
          %v631 = vmul.f32 %v611, 1.442695
          %v632 = vpow.pop %v631
          %v633 = vmul.f32 %v612, 1.442695
          %v634 = vpow.pop %v633
          %v635 = vmul.f32 %v613, 1.442695
          %v636 = vpow.pop %v635
          %v637 = vmul.f32 %v614, 1.442695
          %v638 = vpow.pop %v637
          %v639 = vmul.f32 %v615, 1.442695
          %v640 = vpow.pop %v639
          %v641 = vmul.f32 %v616, 1.442695
          %v642 = vpow.pop %v641
          %v643 = vmul.f32 %v617, 1.442695
          %v644 = vpow.pop %v643
          %v645 = vmul.f32 %v618, 1.442695
          %v646 = vpow.pop %v645
          %v647 = vmul.f32 %v619, 1.442695
          %v648 = vpow.pop %v647
          %v649 = vmul.f32 %v620, 1.442695
          %v650 = vpow.pop %v649
          %v651 = vmul.f32 %v621, 1.442695
          %v652 = vpow.pop %v651
          %v653 = vmul.f32 %v622, 1.442695
          %v654 = vpow.pop %v653
          %v655 = vadd.f32 %v624, %v626
          %v656 = vadd.f32 %v655, %v628
          %v657 = vadd.f32 %v656, %v630
          %v658 = vadd.f32 %v657, %v632
          %v659 = vadd.f32 %v658, %v634
          %v660 = vadd.f32 %v659, %v636
          %v661 = vadd.f32 %v660, %v638
          %v662 = vadd.f32 %v661, %v640
          %v663 = vadd.f32 %v662, %v642
          %v664 = vadd.f32 %v663, %v644
          %v665 = vadd.f32 %v664, %v646
          %v666 = vadd.f32 %v665, %v648
          %v667 = vadd.f32 %v666, %v650
          %v668 = vadd.f32 %v667, %v652
          %v669 = vadd.f32 %v668, %v654
          %v670 = vrot.slane %v669, 4
          %v671 = vadd.f32 %v669, %v670
          %v672 = vrot.slane %v671, 2
          %v673 = vadd.f32 %v671, %v672
          %v674 = vrot.slane %v673, 1
          %v675 = vadd.f32 %v673, %v674
          %676 = vmatpush.msra.mxu0 %v654
          %677 = vmatpush.msra.mxu0 %v652
          %678 = vmatpush.msra.mxu0 %v650
          %679 = vmatpush.msra.mxu0 %v648
          %680 = vmatpush.msra.mxu0 %v646
          %681 = vmatpush.msra.mxu0 %v644
          %682 = vmatpush.msra.mxu0 %v642
          %683 = vmatpush.msra.mxu0 %v640
          %684 = vmatpush.msra.mxu0 %v638
          %685 = vmatpush.msra.mxu0 %v636
          %686 = vmatpush.msra.mxu0 %v634
          %687 = vmatpush.msra.mxu0 %v632
          %688 = vmatpush.msra.mxu0 %v630
          %689 = vmatpush.msra.mxu0 %v628
          %690 = vmatpush.msra.mxu0 %v626
          %691 = vmatpush.msra.mxu0 %v624
          %692 = vmatmul.f32.gmra.mxu0 %v420
          %v693 = vpop.f32.mrf.mxu0
          %v694 = vadd.f32 0.0, %v693
          %695 = vmatmul.f32.gmra.mxu0 %v421
          %v696 = vpop.f32.mrf.mxu0
          %v697 = vadd.f32 0.0, %v696
          %698 = vdwg.mxu0
          %v699 = vrcp.pop %v675
          %v700 = vmul.f32 %v694, %v699
          %v701 = vmul.f32 %v697, %v699
          %s702 = scalar_lea.vmem %s368, %s412 [#allocation8]
          %703 = vst [vmem:[%s702] sm:$0xff] %v700
          %704 = vst [vmem:[%s702 + $0x8] sm:$0xff] %v701
        $region49: #{tpu_custom_call.1} parent=31 // loop_footer
          %s411 = sadd.s32 1, %s407
        $region50: #{tpu_custom_call.1} parent=31 // loop_footer_branch
          %406 = sbr.rel target = $region46
        $region51: #{tpu_custom_call.1} parent=31 // loop_exit
          _
        %s705 = sand.u32 %s125, 1
        %s706 = scalar_lea.sflag [#allocation4], %s705
        %s707 = sand.u32 %s125, 1
        %s708 = smul.addr %s707, 32
        %s709 = scalar_lea.vmem [#allocation8], %s708
        // Predicated region
        $region52: #{tpu_custom_call.1} parent=31 // pred_check
          %p710 = pneg %p135
        $region53: #{tpu_custom_call.1} parent=31 // pred_check_branch
          %712 = sbr.rel (%p710) target = $region55
        $region54: #{tpu_custom_call.1} parent=31 // pred_region
          %s713 = smul.u32 2, %s27
          %715 = vsyncadd %s706, 0
          %s716 = smul.addr %s713, 2
          %s717 = sadd.s32 %s28, %s716
          %s718 = smul.addr %s717, 8
          %s719 = scalar_lea.hbm %s3, %s718
          %s720 = sshll.u32 %s709, 4
          %s721 = int_to_ptr.vmem [resolvable:$true] %s720
          %s722 = sshll.u32 %s719, 4
          %s723 = int_to_ptr.hbm [resolvable:$true] %s722
          %728 = dma.vmem_to_hbm [thread:$0]  %s721, 512, %s723, %s706, 128, 128, 8
        $region55: #{tpu_custom_call.1} parent=31 // pred_fallthru
          _
      $region32: #{tpu_custom_call.1} parent=5 // pred_fallthru
        _
      %p729 = scmp.le.s32.totalorder 2, %s18
      // Predicated region
      $region56: #{tpu_custom_call.1} parent=5 // pred_check
        %p730 = pneg %p729
      $region57: #{tpu_custom_call.1} parent=5 // pred_check_branch
        %732 = sbr.rel (%p730) target = $region59
      $region58: #{tpu_custom_call.1} parent=5 // pred_region
        %s733 = ssub.s32 %s18, 2
        // Predicated region
        $region60: #{tpu_custom_call.1} parent=58 // pred_check
          %p734 = pneg %p141
        $region61: #{tpu_custom_call.1} parent=58 // pred_check_branch
          %736 = sbr.rel (%p734) target = $region63
        $region62: #{tpu_custom_call.1} parent=58 // pred_region
          %s737 = sand.u32 %s126, 1
          %s738 = scalar_lea.sflag [#allocation4], %s737
          %s739 = sand.u32 %s126, 1
          %s740 = smul.addr %s739, 32
          %s741 = scalar_lea.vmem [#allocation8], %s740
          %743 = dma.done %s738, 512
        $region63: #{tpu_custom_call.1} parent=58 // pred_fallthru
          _
      $region59: #{tpu_custom_call.1} parent=5 // pred_fallthru
        _
    $region6: #{tpu_custom_call.1} parent=1 // loop_footer
      %s22 = sadd.s32 1, %s18
    $region7: #{tpu_custom_call.1} parent=1 // loop_footer_branch
      %17 = sbr.rel target = $region3
    $region8: #{tpu_custom_call.1} parent=1 // loop_exit
      _
    %744 = vsyncpa [#allocation3], 1
    %s745 = scalar_lea.sflag [#allocation3], 1
    %746 = vsyncpa %s745, 1
    %747 = vsyncpa [#allocation6], 1
    %s748 = scalar_lea.sflag [#allocation6], 1
    %749 = vsyncpa %s748, 1
    %750 = vsyncpa [#allocation4], 1
    %s751 = scalar_lea.sflag [#allocation4], 1
    %752 = vsyncpa %s751, 1

</llo_original>
